<compile_context>
chip_gen: v5e
topology: v5e:2x2
jax: 0.10.0
libtpu: 0.0.40
codegen_flags: <defaults>
</compile_context>

<pallas_src>
import functools

import jax
import jax.numpy as jnp
from jax.experimental import pallas as pl
from jax.experimental.pallas import tpu as pltpu


# NOTE: 1e-9 is below f32 ULP at ~1.0, so (w + EPS) == w for realistic weights;
# kept only to match the PyTorch reference in intent.
EPS = 1e-9


# ---------------------------------------------------------------------------
# Kernels (head-major: batch on lanes, heads on sublanes)
# ---------------------------------------------------------------------------
def _label_adapt_fwd_kernel(y_ref, w_ref, b_ref, o_ref):
    # y_ref: [1, TILE]   (lane axis = batch, dense loads)
    # w_ref, b_ref: [H, 1]    o_ref: [H, TILE]  (lane-dense stores)
    o_ref[...] = ((w_ref[...] + EPS) * y_ref[...] + b_ref[...]).astype(o_ref.dtype)


def _label_adapt_inv_kernel(y_ref, w_ref, b_ref, o_ref):
    # y_ref: [1, TILE] (1-D labels, broadcast across heads in-VMEM) or
    #        [H, TILE] (2-D labels already per-head).
    # H reciprocals per tile instead of B*H divides (EUP, off the VALU path).
    w_inv = pl.reciprocal(w_ref[...] + EPS)
    o_ref[...] = ((y_ref[...] - b_ref[...]) * w_inv).astype(o_ref.dtype)


# ---------------------------------------------------------------------------
# Tiling helpers
# ---------------------------------------------------------------------------
def _round_up(x: int, m: int) -> int:
    return ((x + m - 1) // m) * m


def _choose_tiling(batch: int, num_head: int, out_bytes: int,
                   tile_lanes: int | None) -> tuple[int, int, int]:
    """Return (tile, grid, padded_batch).

    Auto mode targets ~1 MiB of output per grid step and pads the batch by at
    most 127 lanes (pick step count first, then round the tile up to 128).
    """
    b128 = _round_up(max(batch, 1), 128)
    if tile_lanes is not None:
        tile = min(_round_up(int(tile_lanes), 128), b128)
    else:
        target = max(128, ((1 << 20) // max(1, num_head * out_bytes)) // 128 * 128)
        steps = max(1, pl.cdiv(b128, target))
        tile = _round_up(pl.cdiv(b128, steps), 128)
    grid = pl.cdiv(b128, tile)
    return tile, grid, grid * tile


# ---------------------------------------------------------------------------
# Jitted end-to-end call (layout plumbing + pallas_call in one executable)
# ---------------------------------------------------------------------------
@functools.partial(
    jax.jit,
    static_argnames=("inverse", "tile_lanes", "out_dtype", "min_pallas_batch"),
)
def _label_adapt(y, weight, bias, *, inverse, tile_lanes, out_dtype,
                 min_pallas_batch):
    H = weight.shape[-1]
    y = jnp.asarray(y)

    # Build the head-major [rows, B] view (rows = 1 or H; batch -> lanes).
    if inverse and y.ndim > 1:
        B = y.shape[0]
        y_hm = y.astype(jnp.float32).T                  # [H, B]
    elif inverse:
        B = y.shape[0]
        y_hm = y.astype(jnp.float32).reshape(1, B)      # broadcast in-kernel
    else:
        y_flat = jnp.ravel(y).astype(jnp.float32)       # == torch y.view(-1, 1)
        B = y_flat.shape[0]
        y_hm = y_flat.reshape(1, B)

    if B < min_pallas_batch:
        # Tiny-call fallback: plain JAX so XLA can fuse with neighbours.
        w = weight + EPS
        if inverse:
            yb = y if y.ndim > 1 else jnp.broadcast_to(y.reshape(-1, 1), (B, H))
            return ((yb - bias) / w).astype(out_dtype)
        return (w * y_hm.reshape(-1, 1) + bias).astype(out_dtype)

    out_bytes = jnp.dtype(out_dtype).itemsize
    tile, grid, b_pad = _choose_tiling(B, H, out_bytes, tile_lanes)
    if b_pad != B:
        y_hm = jnp.pad(y_hm, ((0, 0), (0, b_pad - B)))

    rows = y_hm.shape[0]
    kernel = _label_adapt_inv_kernel if inverse else _label_adapt_fwd_kernel

    out_hm = pl.pallas_call(
        kernel,
        out_shape=jax.ShapeDtypeStruct((H, b_pad), out_dtype),
        grid=(grid,),
        in_specs=[
            pl.BlockSpec((rows, tile), lambda i: (0, i)),  # labels (batch on lanes)
            pl.BlockSpec((H, 1), lambda i: (0, 0)),        # weight (resident)
            pl.BlockSpec((H, 1), lambda i: (0, 0)),        # bias   (resident)
        ],
        out_specs=pl.BlockSpec((H, tile), lambda i: (0, i)),
        compiler_params=pltpu.CompilerParams(
            # Batch axis is embarrassingly parallel -> shards across the two
            # TensorCores on v7x; ~1 MiB tiles fit the default scoped-VMEM
            # budget on every generation.
            dimension_semantics=("parallel",),
        ),
    )(y_hm, weight.reshape(H, 1), bias.reshape(H, 1))

    # Slice off the lane padding and return the module's [B, H] contract.
    return out_hm[:, :B].T


# ---------------------------------------------------------------------------
# Wrapper module (parameters live in JAX; hot path is the Pallas kernel)
# ---------------------------------------------------------------------------
class LabelAdaptHeads:
    def __init__(self, num_head: int, key: jax.Array, *,
                 tile_lanes: int | None = None,
                 out_dtype=jnp.float32,
                 min_pallas_batch: int = 0):
        # nn.init.uniform_(weight, 0.75, 1.25); bias = ones / 8
        self.num_head = num_head
        self.weight = jax.random.uniform(
            key, (1, num_head), dtype=jnp.float32, minval=0.75, maxval=1.25)
        self.bias = jnp.ones((1, num_head), dtype=jnp.float32) / 8.0
        self.tile_lanes = tile_lanes          # None -> auto (~1 MiB out / step)
        self.out_dtype = out_dtype            # bf16 halves HBM-write traffic
        self.min_pallas_batch = min_pallas_batch  # 0 = always use Pallas

    def __call__(self, y: jax.Array, inverse: bool = False) -> jax.Array:
        return _label_adapt(
            y, self.weight, self.bias,
            inverse=bool(inverse),
            tile_lanes=self.tile_lanes,
            out_dtype=self.out_dtype,
            min_pallas_batch=self.min_pallas_batch)


# ---------------------------------------------------------------------------
# Demo / self-check
# ---------------------------------------------------------------------------
if __name__ == "__main__":
    key = jax.random.PRNGKey(0)
    k_w, k_y = jax.random.split(key)

    batch = 300        # not a multiple of 128 -> exercises the padded last tile
    num_head = 4

    # tile_lanes=128 forces a multi-step grid even at this small batch.
    heads = LabelAdaptHeads(num_head, k_w, tile_lanes=128)
    heads_auto = LabelAdaptHeads(num_head, k_w)       # default (auto) tile size
    y = jax.random.normal(k_y, (batch,), dtype=jnp.float32)

    # Forward: [B] -> [B, H]
    out_fwd = heads(y, inverse=False)
    jax.block_until_ready(out_fwd)

    # Inverse on 2-D labels: [B, H] -> [B, H]
    out_inv2d = heads(out_fwd, inverse=True)
    jax.block_until_ready(out_inv2d)

    # Inverse on 1-D labels: [B] -> [B, H] (broadcast happens in-kernel)
    out_inv1d = heads(y, inverse=True)
    jax.block_until_ready(out_inv1d)

    # Default-tile path should agree with the forced-small-tile path.
    out_fwd_auto = heads_auto(y, inverse=False)
    jax.block_until_ready(out_fwd_auto)

    # Reference checks in plain JAX
    w = heads.weight + EPS
    ref_fwd = w * y.reshape(-1, 1) + heads.bias
    ref_inv2d = (out_fwd - heads.bias) / w
    ref_inv1d = (jnp.broadcast_to(y.reshape(-1, 1), (batch, num_head))
                 - heads.bias) / w

    assert out_fwd.shape == (batch, num_head)
    assert out_inv2d.shape == (batch, num_head)
    assert out_inv1d.shape == (batch, num_head)
    assert jnp.allclose(out_fwd, ref_fwd, atol=1e-5, rtol=1e-5)
    assert jnp.allclose(out_fwd_auto, ref_fwd, atol=1e-5, rtol=1e-5)
    assert jnp.allclose(out_inv2d, ref_inv2d, atol=1e-5, rtol=1e-5)
    assert jnp.allclose(out_inv1d, ref_inv1d, atol=1e-5, rtol=1e-5)
    # Round trip: inverse(forward(y)) recovers y broadcast across heads.
    assert jnp.allclose(out_inv2d,
                        jnp.broadcast_to(y.reshape(-1, 1), (batch, num_head)),
                        atol=1e-4, rtol=1e-4)

    print("KERNEL_OK")
</pallas_src>

<mosaic_0001>
module attributes {stable_mosaic.version = 11 : i64} {
  func.func @_label_adapt_fwd_kernel(%arg0: i32, %arg1: memref<1x128xf32, #tpu.memory_space<vmem>>, %arg2: memref<4x1xf32, #tpu.memory_space<vmem>>, %arg3: memref<4x1xf32, #tpu.memory_space<vmem>>, %arg4: memref<4x128xf32, #tpu.memory_space<vmem>>) attributes {dimension_semantics = [#tpu.dimension_semantics<parallel>], iteration_bounds = array<i64: 3>, scalar_prefetch = 0 : i64, scratch_operands = 0 : i64, tpu.core_type = #tpu.core_type<tc>, window_params = [{transform_indices = @transform_0, window_bounds = array<i64: 1, 128>}, {pipeline_mode = #tpu.pipeline_mode<synchronous>, transform_indices = @transform_1, window_bounds = array<i64: 4, 1>}, {pipeline_mode = #tpu.pipeline_mode<synchronous>, transform_indices = @transform_2, window_bounds = array<i64: 4, 1>}, {transform_indices = @transform_3, window_bounds = array<i64: 4, 128>}]} {
    %c0 = arith.constant 0 : index
    %c0_0 = arith.constant 0 : index
    %0 = vector.load %arg2[%c0, %c0_0] : memref<4x1xf32, #tpu.memory_space<vmem>>, vector<4x1xf32>
    %cst = arith.constant 9.99999971E-10 : f32
    %1 = vector.broadcast %cst : f32 to vector<4x1xf32>
    %2 = arith.addf %0, %1 : vector<4x1xf32>
    %c0_1 = arith.constant 0 : index
    %c0_2 = arith.constant 0 : index
    %3 = vector.load %arg1[%c0_1, %c0_2] : memref<1x128xf32, #tpu.memory_space<vmem>>, vector<1x128xf32>
    %4 = vector.broadcast %2 : vector<4x1xf32> to vector<4x128xf32>
    %5 = vector.broadcast %3 : vector<1x128xf32> to vector<4x128xf32>
    %6 = arith.mulf %4, %5 : vector<4x128xf32>
    %c0_3 = arith.constant 0 : index
    %c0_4 = arith.constant 0 : index
    %7 = vector.load %arg3[%c0_3, %c0_4] : memref<4x1xf32, #tpu.memory_space<vmem>>, vector<4x1xf32>
    %8 = vector.broadcast %7 : vector<4x1xf32> to vector<4x128xf32>
    %9 = arith.addf %6, %8 : vector<4x128xf32>
    %c0_5 = arith.constant 0 : index
    %c0_6 = arith.constant 0 : index
    %10 = vector.load %arg4[%c0_5, %c0_6] : memref<4x128xf32, #tpu.memory_space<vmem>>, vector<4x128xf32>
    tpu.vector_store %arg4[%c0_5, %c0_6], %9 {strides = array<i32>} : memref<4x128xf32, #tpu.memory_space<vmem>>, vector<4x128xf32>,
    return
  }
  func.func @transform_0(%arg0: i32) -> (i32, i32) {
    %c0_i32 = arith.constant 0 : i32
    %c0_i32_0 = arith.constant 0 : i32
    return %c0_i32, %arg0 : i32, i32
  }
  func.func @transform_1(%arg0: i32) -> (i32, i32) {
    %c0_i32 = arith.constant 0 : i32
    %c0_i32_0 = arith.constant 0 : i32
    %c0_i32_1 = arith.constant 0 : i32
    return %c0_i32, %c0_i32_0 : i32, i32
  }
  func.func @transform_2(%arg0: i32) -> (i32, i32) {
    %c0_i32 = arith.constant 0 : i32
    %c0_i32_0 = arith.constant 0 : i32
    %c0_i32_1 = arith.constant 0 : i32
    return %c0_i32, %c0_i32_0 : i32, i32
  }
  func.func @transform_3(%arg0: i32) -> (i32, i32) {
    %c0_i32 = arith.constant 0 : i32
    %c0_i32_0 = arith.constant 0 : i32
    return %c0_i32, %arg0 : i32, i32
  }
}

</mosaic_0001>

<llo_original>
// kernel: _label_adapt.1
$region0: #{_label_adapt.1}
  #allocation0 [shape = 'u32[]', space=smem, size = 0x4, offset = 0x4, fixed_abs, tag = 'smem constant byte address 0x4 - core index']
  #allocation1 [shape = 'u32[72,128]{1,0:T(1,128)}', space=vmem, size = 0x9000, scoped, tag = 'internal scratch']
  %s0 = inlined_call_operand.vmem [shape: f32[1,384], index: 0, kind: input, shape index: {}]
  %s1 = inlined_call_operand.vmem [shape: f32[4,1], index: 1, kind: input, shape index: {}]
  %s2 = inlined_call_operand.vmem [shape: f32[4,1], index: 2, kind: input, shape index: {}]
  %s3 = inlined_call_operand.vmem [shape: f32[4,384], index: 3, kind: output, shape index: {}]
  %s4 = sld [smem:[#allocation0]]
  $region45: #{_label_adapt.1} parent=0
    _
  %s6 = ssub.s32 1, %s4
  %s7 = scalar_select 0, %s6, %s4
  loop: start=0, step=1, limit=5
  $region2: #{_label_adapt.1} parent=0 // loop_pre_header
    _
  $region3: #{_label_adapt.1} parent=0 // loop_header
    %s9 = sphi 0, %s13
    %p10 = scmp.ge.s32.totalorder %s9, 5
    %s19 = sphi 0, %s21
    %s22 = sphi 0, %s19
    %s23 = sphi 0, %s22
    %s39 = sphi 0, %s23
    %s43 = sphi 0, %s43
    %s45 = sphi 0, %s43
    %s46 = sphi 0, %s45
    %s60 = sphi 0, %s46
    %s64 = sphi 0, %s64
    %s66 = sphi 0, %s64
    %s67 = sphi 0, %s66
    %s81 = sphi 0, %s67
    %s87 = sphi 0, %s89
    %s90 = sphi 0, %s87
    %s91 = sphi 0, %s90
    %s107 = sphi 0, %s91
  $region4: #{_label_adapt.1} parent=0 // loop_header_branch
    %12 = sbr.rel (%p10) target = $region8
  $region5: #{_label_adapt.1} parent=0 // loop_body
    %s14 = ssub.s32 %s9, 1
    %s15 = ssub.s32 %s9, 2
    %s16 = sadd.s32 %s9, 1
    %s17 = ssub.s32 %s9, %s16
    %p18 = scmp.eq.s32.totalorder %s17, 0
    %s20 = sadd.s32 %s19, 1
    %s21 = scalar_select %p18, %s19, %s20
    %p24 = pneg %p18
    %p25 = scmp.eq.s32.totalorder %s9, 2
    %p26 = por %p24, %p25
    %p27 = scmp.ne.s32.totalorder %s19, %s22
    %p28 = scmp.eq.s32.totalorder %s9, 0
    %p29 = por %p27, %p28
    %p30 = scmp.ne.s32.totalorder %s19, %s22
    %p31 = scmp.eq.s32.totalorder %s14, 2
    %p32 = por %p30, %p31
    %p33 = scmp.ne.s32.totalorder %s22, %s23
    %p34 = scmp.eq.s32.totalorder %s14, 0
    %p35 = por %p33, %p34
    %p36 = scmp.ne.s32.totalorder %s22, %s23
    %p37 = scmp.eq.s32.totalorder %s15, 2
    %p38 = por %p36, %p37
    %p40 = scmp.ne.s32.totalorder %s23, %s39
    %p41 = scmp.eq.s32.totalorder %s15, 0
    %p42 = por %p40, %p41
    %s44 = sadd.s32 %s43, 1
    %p47 = scmp.eq.s32.totalorder %s9, 2
    %p48 = scmp.ne.s32.totalorder %s43, %s45
    %p49 = scmp.eq.s32.totalorder %s9, 0
    %p50 = por %p48, %p49
    %p51 = scmp.ne.s32.totalorder %s43, %s45
    %p52 = scmp.eq.s32.totalorder %s14, 2
    %p53 = por %p51, %p52
    %p54 = scmp.ne.s32.totalorder %s45, %s46
    %p55 = scmp.eq.s32.totalorder %s14, 0
    %p56 = por %p54, %p55
    %p57 = scmp.ne.s32.totalorder %s45, %s46
    %p58 = scmp.eq.s32.totalorder %s15, 2
    %p59 = por %p57, %p58
    %p61 = scmp.ne.s32.totalorder %s46, %s60
    %p62 = scmp.eq.s32.totalorder %s15, 0
    %p63 = por %p61, %p62
    %s65 = sadd.s32 %s64, 1
    %p68 = scmp.eq.s32.totalorder %s9, 2
    %p69 = scmp.ne.s32.totalorder %s64, %s66
    %p70 = scmp.eq.s32.totalorder %s9, 0
    %p71 = por %p69, %p70
    %p72 = scmp.ne.s32.totalorder %s64, %s66
    %p73 = scmp.eq.s32.totalorder %s14, 2
    %p74 = por %p72, %p73
    %p75 = scmp.ne.s32.totalorder %s66, %s67
    %p76 = scmp.eq.s32.totalorder %s14, 0
    %p77 = por %p75, %p76
    %p78 = scmp.ne.s32.totalorder %s66, %s67
    %p79 = scmp.eq.s32.totalorder %s15, 2
    %p80 = por %p78, %p79
    %p82 = scmp.ne.s32.totalorder %s67, %s81
    %p83 = scmp.eq.s32.totalorder %s15, 0
    %p84 = por %p82, %p83
    %s85 = ssub.s32 %s9, %s16
    %p86 = scmp.eq.s32.totalorder %s85, 0
    %s88 = sadd.s32 %s87, 1
    %s89 = scalar_select %p86, %s87, %s88
    %p92 = pneg %p86
    %p93 = scmp.eq.s32.totalorder %s9, 2
    %p94 = por %p92, %p93
    %p95 = scmp.ne.s32.totalorder %s87, %s90
    %p96 = scmp.eq.s32.totalorder %s9, 0
    %p97 = por %p95, %p96
    %p98 = scmp.ne.s32.totalorder %s87, %s90
    %p99 = scmp.eq.s32.totalorder %s14, 2
    %p100 = por %p98, %p99
    %p101 = scmp.ne.s32.totalorder %s90, %s91
    %p102 = scmp.eq.s32.totalorder %s14, 0
    %p103 = por %p101, %p102
    %p104 = scmp.ne.s32.totalorder %s90, %s91
    %p105 = scmp.eq.s32.totalorder %s15, 2
    %p106 = por %p104, %p105
    %p108 = scmp.ne.s32.totalorder %s91, %s107
    %p109 = scmp.eq.s32.totalorder %s15, 0
    %p110 = por %p108, %p109
    %p111 = scmp.le.s32.totalorder 1, %s9
    %p112 = scmp.lt.s32.totalorder %s9, 4
    %p113 = pnand %p111, %p112
    %p114 = pneg %p113
    // Predicated region
    $region9: #{_label_adapt.1} parent=5 // pred_check
      _
    $region10: #{_label_adapt.1} parent=5 // pred_check_branch
      %116 = sbr.rel (%p113) target = $region12
    $region11: #{_label_adapt.1} parent=5 // pred_region
      %s117 = ssub.s32 %s9, 1
      // Predicated region
      $region13: #{_label_adapt.1} parent=11 // pred_check
        %p118 = pneg %p56
      $region14: #{_label_adapt.1} parent=11 // pred_check_branch
        %120 = sbr.rel (%p118) target = $region16
      $region15: #{_label_adapt.1} parent=11 // pred_region
        _
      $region16: #{_label_adapt.1} parent=11 // pred_fallthru
        _
      // Predicated region
      $region17: #{_label_adapt.1} parent=11 // pred_check
        %p121 = pneg %p77
      $region18: #{_label_adapt.1} parent=11 // pred_check_branch
        %123 = sbr.rel (%p121) target = $region20
      $region19: #{_label_adapt.1} parent=11 // pred_region
        _
      $region20: #{_label_adapt.1} parent=11 // pred_fallthru
        _
    $region12: #{_label_adapt.1} parent=5 // pred_fallthru
      _
    %p124 = scmp.lt.s32.totalorder %s9, 3
    // Predicated region
    $region21: #{_label_adapt.1} parent=5 // pred_check
      %p125 = pneg %p124
    $region22: #{_label_adapt.1} parent=5 // pred_check_branch
      %127 = sbr.rel (%p125) target = $region24
    $region23: #{_label_adapt.1} parent=5 // pred_region
      // Predicated region
      $region25: #{_label_adapt.1} parent=23 // pred_check
        %p128 = pneg %p29
      $region26: #{_label_adapt.1} parent=23 // pred_check_branch
        %130 = sbr.rel (%p128) target = $region28
      $region27: #{_label_adapt.1} parent=23 // pred_region
        %p131 = scmp.lt.s32.totalorder %s9, 2
        %s132 = scalar_select %p131, %s9, 2
        %s133 = scalar_lea.vmem %s0, %s132
      $region28: #{_label_adapt.1} parent=23 // pred_fallthru
        _
    $region24: #{_label_adapt.1} parent=5 // pred_fallthru
      _
    %p134 = scmp.le.s32.totalorder 1, %s9
    %p135 = scmp.lt.s32.totalorder %s9, 4
    %p136 = pnand %p134, %p135
    %p137 = pneg %p136
    // Predicated region
    $region29: #{_label_adapt.1} parent=5 // pred_check
      _
    $region30: #{_label_adapt.1} parent=5 // pred_check_branch
      %139 = sbr.rel (%p136) target = $region32
    $region31: #{_label_adapt.1} parent=5 // pred_region
      %s140 = ssub.s32 %s9, 1
      %p141 = scmp.lt.s32.totalorder %s14, 2
      %s142 = scalar_select %p141, %s14, 2
      %s143 = scalar_lea.vmem %s0, %s142
      %p144 = pneg %p35
      %p145 = pneg %p32
      %p146 = pneg %p56
      %p147 = pneg %p53
      %p148 = pneg %p77
      %p149 = pneg %p74
      %p150 = pneg %p103
      %p151 = pneg %p100
      %p152 = scmp.lt.s32.totalorder %s14, 2
      %s153 = scalar_select %p152, %s14, 2
      %s154 = smul.addr %s153, 4
      %s155 = scalar_lea.vmem %s3, %s154
      %p156 = scmp.lt.s32.totalorder %s14, 2
      %s157 = scalar_select %p156, %s14, 2
      %s158 = scalar_lea.vmem %s0, %s157
      %p159 = scmp.lt.s32.totalorder %s14, 2
      %s160 = scalar_select %p159, %s14, 2
      %s161 = smul.addr %s160, 4
      %s162 = scalar_lea.vmem %s3, %s161
      %v163 = vld [vmem:[%s1] sm:$0xf]
      %v164 = vadd.f32 %v163, 1e-09
      %v165 = vld [vmem:[%s158] sm:$0x1]
      %167 = vset.pattern.permute.xlu0 0
      %168 = vperm.xlu0 %167, %v164
      %v169 = vpop.permute.xlu0 %168
      %v172 = vperm.slane %v165, 0
      %v174 = vmul.f32 %v169, %v172
      %v175 = vld [vmem:[%s2] sm:$0xf]
      %177 = vset.pattern.permute.xlu0 0
      %178 = vperm.xlu0 %177, %v175
      %v179 = vpop.permute.xlu0 %178
      %v181 = vadd.f32 %v174, %v179
      %182 = vst [vmem:[%s162] sm:$0xf] %v181
      %p183 = scmp.lt.s32.totalorder %s14, 2
      %s184 = scalar_select %p183, %s14, 2
      %s185 = smul.addr %s184, 4
      %s186 = scalar_lea.vmem %s3, %s185
      // Predicated region
      $region33: #{_label_adapt.1} parent=31 // pred_check
        %p187 = pneg %p100
      $region34: #{_label_adapt.1} parent=31 // pred_check_branch
        %189 = sbr.rel (%p187) target = $region36
      $region35: #{_label_adapt.1} parent=31 // pred_region
        _
      $region36: #{_label_adapt.1} parent=31 // pred_fallthru
        _
    $region32: #{_label_adapt.1} parent=5 // pred_fallthru
      _
    %p190 = scmp.le.s32.totalorder 2, %s9
    // Predicated region
    $region37: #{_label_adapt.1} parent=5 // pred_check
      %p191 = pneg %p190
    $region38: #{_label_adapt.1} parent=5 // pred_check_branch
      %193 = sbr.rel (%p191) target = $region40
    $region39: #{_label_adapt.1} parent=5 // pred_region
      %s194 = ssub.s32 %s9, 2
      // Predicated region
      $region41: #{_label_adapt.1} parent=39 // pred_check
        %p195 = pneg %p106
      $region42: #{_label_adapt.1} parent=39 // pred_check_branch
        %197 = sbr.rel (%p195) target = $region44
      $region43: #{_label_adapt.1} parent=39 // pred_region
        %p198 = scmp.lt.s32.totalorder %s15, 2
        %s199 = scalar_select %p198, %s15, 2
        %s200 = smul.addr %s199, 4
        %s201 = scalar_lea.vmem %s3, %s200
      $region44: #{_label_adapt.1} parent=39 // pred_fallthru
        _
    $region40: #{_label_adapt.1} parent=5 // pred_fallthru
      _
  $region6: #{_label_adapt.1} parent=0 // loop_footer
    %s13 = sadd.s32 1, %s9
  $region7: #{_label_adapt.1} parent=0 // loop_footer_branch
    %8 = sbr.rel target = $region3
  $region8: #{_label_adapt.1} parent=0 // loop_exit
    _

</llo_original>
